<compile_context>
chip_gen: v7x
topology: tpu7x:2x2x1
jax: 0.10.0
libtpu: 0.0.40
codegen_flags: <defaults>
</compile_context>

<pallas_src>
import math

import jax
import jax.numpy as jnp
from jax.experimental import pallas as pl
from jax.experimental.pallas import tpu as pltpu


_INV_SQRT2 = 1.0 / math.sqrt(2.0)


def _round_up(n, m):
    return ((n + m - 1) // m) * m


_VMEM_LIMIT_CACHE = None


def _vmem_limit_bytes():
    """~85% of the chip's VMEM capacity; conservative 64 MiB fallback."""
    global _VMEM_LIMIT_CACHE
    if _VMEM_LIMIT_CACHE is None:
        cap = None
        try:
            info = pltpu.get_tpu_info()
            cap = getattr(info, "vmem_capacity_bytes", None)
        except Exception:
            cap = None
        if not cap:
            cap = 64 * 1024 * 1024  # v7x per-TC VMEM (smallest across gens)
        _VMEM_LIMIT_CACHE = int(cap * 0.85)
    return _VMEM_LIMIT_CACHE


def feedforward_kernel(x_ref, w1a_ref, w1b_ref, b1a_ref, b1b_ref,
                       w2_ref, b2_ref, o_ref, acc_ref):
    """One (row-tile, H-chunk) step of the FeedForward forward pass.

    Grid = (M tiles [parallel], H chunks [arbitrary / reduction]).

    x_ref  : (tm, Cinp)    activations (compute dtype, e.g. bf16)
    w1a_ref: (Cinp, tH)    GEGLU "value" projection chunk
    w1b_ref: (Cinp, tH)    GEGLU "gate"  projection chunk
    b1a_ref: (1, tH)       value bias chunk (f32)
    b1b_ref: (1, tH)       gate  bias chunk (f32)
    w2_ref : (tH, Coutp)   output projection chunk
    b2_ref : (1, Coutp)    output bias (f32)
    o_ref  : (tm, Coutp)   output tile (written on last H chunk)
    acc_ref: (tm, Coutp)   f32 accumulator scratch
    """
    k = pl.program_id(1)

    @pl.when(k == 0)
    def _():
        acc_ref[...] = jnp.zeros_like(acc_ref)

    x = x_ref[...]

    # GEGLU projections for this H chunk: MXU matmuls with f32 accumulation.
    pa = jnp.dot(x, w1a_ref[...], preferred_element_type=jnp.float32)
    pa = pa + b1a_ref[...]
    pb = jnp.dot(x, w1b_ref[...], preferred_element_type=jnp.float32)
    pb = pb + b1b_ref[...]

    # Exact (erf-based) GELU, matching torch.nn.functional.gelu's default.
    # (lax.erf is a VPU polynomial; see TODO at top about tanh-approx.)
    gated = pa * (0.5 * pb * (1.0 + jax.lax.erf(pb * _INV_SQRT2)))

    # Dropout(p=0.0) is the identity.
    # Output projection of this H chunk, accumulated in f32 across chunks.
    acc_ref[...] += jnp.dot(gated.astype(w2_ref.dtype), w2_ref[...],
                            preferred_element_type=jnp.float32)

    @pl.when(k == pl.num_programs(1) - 1)
    def _():
        o_ref[...] = (acc_ref[...] + b2_ref[...]).astype(o_ref.dtype)


def prepare_params(params, *, compute_dtype=jnp.bfloat16, h_block=512):
    """Pad / cast / split the FeedForward weights ONCE (hoisted out of the
    per-call hot path).

    params: (w1 [Cin, 2H], b1 [2H], w2 [H, Cout], b2 [Cout]) stored as (in, out).
    Returns (padded_arrays, meta) for feedforward().
    """
    w1, b1, w2, b2 = params
    Cin, two_h = w1.shape
    H = two_h // 2
    Cout = w2.shape[1]
    assert w2.shape[0] == H and two_h == 2 * H

    cdt = jnp.dtype(compute_dtype)
    f32 = jnp.float32

    Cinp = _round_up(Cin, 128)
    Coutp = _round_up(Cout, 128)
    # Pick the H chunk size here so Hp is an exact multiple of it (no partial
    # blocks -> no out-of-bounds weight reads inside the kernel).
    tH = min(_round_up(h_block, 128), _round_up(H, 128))
    Hp = _round_up(H, tH)

    w1a_p = jnp.zeros((Cinp, Hp), cdt).at[:Cin, :H].set(w1[:, :H].astype(cdt))
    w1b_p = jnp.zeros((Cinp, Hp), cdt).at[:Cin, :H].set(w1[:, H:].astype(cdt))
    b1a_p = jnp.zeros((1, Hp), f32).at[0, :H].set(b1[:H].astype(f32))
    b1b_p = jnp.zeros((1, Hp), f32).at[0, :H].set(b1[H:].astype(f32))
    w2_p = jnp.zeros((Hp, Coutp), cdt).at[:H, :Cout].set(w2.astype(cdt))
    b2_p = jnp.zeros((1, Coutp), f32).at[0, :Cout].set(b2.astype(f32))

    meta = dict(Cin=Cin, H=H, Cout=Cout, Cinp=Cinp, Hp=Hp, Coutp=Coutp,
                tH=tH, compute_dtype=cdt)
    return (w1a_p, w1b_p, b1a_p, b1b_p, w2_p, b2_p), meta


def feedforward(x, prepped, *, tm=None):
    """x: [B, S, in_features] -> [B, S, out_features].

    `prepped` must come from prepare_params() (weights padded/cast once).
    """
    arrays, meta = prepped
    w1a_p, w1b_p, b1a_p, b1b_p, w2_p, b2_p = arrays
    Cin, H, Cout = meta["Cin"], meta["H"], meta["Cout"]
    Cinp, Hp, Coutp, tH = meta["Cinp"], meta["Hp"], meta["Coutp"], meta["tH"]
    cdt = meta["compute_dtype"]
    out_dtype = x.dtype

    B, S, xc = x.shape
    assert xc == Cin

    # --- Tile geometry (lane-dense, unmasked loads/stores) ---
    M = B * S
    vmem_limit = _vmem_limit_bytes()
    if tm is None:
        # Bigger row tile on 128-MiB-VMEM parts (v5e/v6e) for large M;
        # keep 256 on v7x (64 MiB / TC).
        tm = 512 if (vmem_limit > 96 * 1024 * 1024 and M >= 512) else 256
    tm = _round_up(tm, 128)
    tm_eff = min(tm, _round_up(M, 128))      # don't over-pad tiny inputs
    Mp = _round_up(M, tm_eff)

    # --- Pad activations (skipped entirely when already aligned) ---
    x2d = x.reshape(M, Cin)
    if M == Mp and Cin == Cinp:
        x_pad = x2d.astype(cdt)
    else:
        x_pad = jnp.zeros((Mp, Cinp), cdt).at[:M, :Cin].set(x2d.astype(cdt))

    grid = (Mp // tm_eff, Hp // tH)

    # Advisory cost estimate so XLA can schedule surrounding ops around us.
    cost = pl.CostEstimate(
        flops=int(2 * Mp * Cinp * 2 * Hp + 2 * Mp * Hp * Coutp),
        transcendentals=int(Mp * Hp),
        bytes_accessed=int(
            x_pad.size * cdt.itemsize
            + (w1a_p.size + w1b_p.size + w2_p.size) * cdt.itemsize
            + (b1a_p.size + b1b_p.size + b2_p.size) * 4
            + Mp * Coutp * jnp.dtype(out_dtype).itemsize),
    )

    out2d = pl.pallas_call(
        feedforward_kernel,
        out_shape=jax.ShapeDtypeStruct((Mp, Coutp), out_dtype),
        grid_spec=pltpu.PrefetchScalarGridSpec(
            num_scalar_prefetch=0,
            grid=grid,
            in_specs=[
                pl.BlockSpec((tm_eff, Cinp), lambda i, k: (i, 0)),   # x row tile
                pl.BlockSpec((Cinp, tH), lambda i, k: (0, k)),       # W1a chunk
                pl.BlockSpec((Cinp, tH), lambda i, k: (0, k)),       # W1b chunk
                pl.BlockSpec((1, tH), lambda i, k: (0, k)),          # b1a chunk
                pl.BlockSpec((1, tH), lambda i, k: (0, k)),          # b1b chunk
                pl.BlockSpec((tH, Coutp), lambda i, k: (k, 0)),      # W2 chunk
                pl.BlockSpec((1, Coutp), lambda i, k: (0, 0)),       # b2
            ],
            out_specs=pl.BlockSpec((tm_eff, Coutp), lambda i, k: (i, 0)),
            scratch_shapes=[pltpu.VMEM((tm_eff, Coutp), jnp.float32)],
        ),
        compiler_params=pltpu.CompilerParams(
            dimension_semantics=("parallel", "arbitrary"),
            vmem_limit_bytes=vmem_limit,
        ),
        cost_estimate=cost,
    )(x_pad, w1a_p, w1b_p, b1a_p, b1b_p, w2_p, b2_p)

    if Mp != M or Coutp != Cout:
        out2d = out2d[:M, :Cout]
    return out2d.reshape(B, S, Cout)


def init_params(key, in_features, out_features, dtype=jnp.float32):
    """Synthetic parameters matching the PyTorch module shapes.

    GEGLU.proj : Linear(in_features, out_features*4*2)  (fused, chunked at H)
    net[2]     : Linear(out_features*4, out_features)
    Weights are stored transposed to (in, out) for x @ W.
    """
    H = out_features * 4
    k1, k2, k3, k4 = jax.random.split(key, 4)
    s1 = 1.0 / math.sqrt(in_features)
    s2 = 1.0 / math.sqrt(H)
    w1 = jax.random.uniform(k1, (in_features, 2 * H), dtype, -s1, s1)
    b1 = jax.random.uniform(k2, (2 * H,), dtype, -s1, s1)
    w2 = jax.random.uniform(k3, (H, out_features), dtype, -s2, s2)
    b2 = jax.random.uniform(k4, (out_features,), dtype, -s2, s2)
    return (w1, b1, w2, b2)


def feedforward_ref(x, params):
    """Pure-JAX f32 reference for correctness checking."""
    w1, b1, w2, b2 = params
    H = w2.shape[0]
    proj = x @ w1 + b1
    x1, x2 = proj[..., :H], proj[..., H:]
    h = x1 * (0.5 * x2 * (1.0 + jax.lax.erf(x2 / math.sqrt(2.0))))
    return h @ w2 + b2


if __name__ == "__main__":
    key = jax.random.PRNGKey(0)
    kx, kp = jax.random.split(key)

    B, S = 2, 8
    in_features = 32
    out_features = 32          # hidden = out_features * 4 = 128

    x = jax.random.normal(kx, (B, S, in_features), dtype=jnp.float32)
    params = init_params(kp, in_features, out_features)

    # Weight padding / casting done once, outside the per-call hot path.
    prepped = prepare_params(params)

    out = jax.block_until_ready(feedforward(x, prepped))
    ref = feedforward_ref(x, params)

    assert out.shape == (B, S, out_features)
    # bf16 MXU inputs with f32 accumulation -> loosened tolerance vs f32 ref.
    max_err = float(jnp.max(jnp.abs(out - ref)))
    assert jnp.allclose(out, ref, atol=3e-2, rtol=3e-2), (
        f"mismatch vs reference (max abs err {max_err})")

    print("KERNEL_OK")
</pallas_src>

<mosaic_0001>
module attributes {stable_mosaic.version = 11 : i64} {
  func.func @feedforward_kernel(%arg0: i32, %arg1: i32, %arg2: memref<128x128xbf16, #tpu.memory_space<vmem>>, %arg3: memref<128x128xbf16, #tpu.memory_space<vmem>>, %arg4: memref<128x128xbf16, #tpu.memory_space<vmem>>, %arg5: memref<1x128xf32, #tpu.memory_space<vmem>>, %arg6: memref<1x128xf32, #tpu.memory_space<vmem>>, %arg7: memref<128x128xbf16, #tpu.memory_space<vmem>>, %arg8: memref<1x128xf32, #tpu.memory_space<vmem>>, %arg9: memref<128x128xf32, #tpu.memory_space<vmem>>, %arg10: memref<128x128xf32, #tpu.memory_space<vmem>>) attributes {dimension_semantics = [#tpu.dimension_semantics<parallel>, #tpu.dimension_semantics<arbitrary>], iteration_bounds = array<i64: 1, 1>, scalar_prefetch = 0 : i64, scratch_operands = 1 : i64, tpu.core_type = #tpu.core_type<tc>, window_params = [{transform_indices = @transform_0, window_bounds = array<i64: 128, 128>}, {transform_indices = @transform_1, window_bounds = array<i64: 128, 128>}, {transform_indices = @transform_2, window_bounds = array<i64: 128, 128>}, {transform_indices = @transform_3, window_bounds = array<i64: 1, 128>}, {transform_indices = @transform_4, window_bounds = array<i64: 1, 128>}, {transform_indices = @transform_5, window_bounds = array<i64: 128, 128>}, {pipeline_mode = #tpu.pipeline_mode<synchronous>, transform_indices = @transform_6, window_bounds = array<i64: 1, 128>}, {transform_indices = @transform_7, window_bounds = array<i64: 128, 128>}]} {
    %c0_i32 = arith.constant 0 : i32
    %0 = arith.cmpi eq, %arg1, %c0_i32 : i32
    %1 = arith.extui %0 : i1 to i32
    %c0_i32_0 = arith.constant 0 : i32
    %2 = arith.cmpi ne, %1, %c0_i32_0 : i32
    scf.if %2 {
      %cst_23 = arith.constant 0.000000e+00 : f32
      %32 = vector.broadcast %cst_23 : f32 to vector<128x128xf32>
      %c0_24 = arith.constant 0 : index
      %c0_25 = arith.constant 0 : index
      %33 = vector.load %arg10[%c0_24, %c0_25] : memref<128x128xf32, #tpu.memory_space<vmem>>, vector<128x128xf32>
      tpu.vector_store %arg10[%c0_24, %c0_25], %32 {strides = array<i32>} : memref<128x128xf32, #tpu.memory_space<vmem>>, vector<128x128xf32>,
    } else {
    }
    %c0 = arith.constant 0 : index
    %c0_1 = arith.constant 0 : index
    %3 = vector.load %arg2[%c0, %c0_1] : memref<128x128xbf16, #tpu.memory_space<vmem>>, vector<128x128xbf16>
    %c0_2 = arith.constant 0 : index
    %c0_3 = arith.constant 0 : index
    %4 = vector.load %arg3[%c0_2, %c0_3] : memref<128x128xbf16, #tpu.memory_space<vmem>>, vector<128x128xbf16>
    %cst = arith.constant dense<0.000000e+00> : vector<128x128xf32>
    %5 = tpu.matmul %3, %4, %cst {dimension_numbers = #tpu.dot_dimension_numbers<[1], [0], [0], [1], [0, 0, 1, 1], [], []>} : vector<128x128xbf16>, vector<128x128xbf16>, vector<128x128xf32> -> vector<128x128xf32>
    %c0_4 = arith.constant 0 : index
    %c0_5 = arith.constant 0 : index
    %6 = vector.load %arg5[%c0_4, %c0_5] : memref<1x128xf32, #tpu.memory_space<vmem>>, vector<1x128xf32>
    %7 = vector.broadcast %6 : vector<1x128xf32> to vector<128x128xf32>
    %8 = arith.addf %5, %7 : vector<128x128xf32>
    %c0_6 = arith.constant 0 : index
    %c0_7 = arith.constant 0 : index
    %9 = vector.load %arg4[%c0_6, %c0_7] : memref<128x128xbf16, #tpu.memory_space<vmem>>, vector<128x128xbf16>
    %cst_8 = arith.constant dense<0.000000e+00> : vector<128x128xf32>
    %10 = tpu.matmul %3, %9, %cst_8 {dimension_numbers = #tpu.dot_dimension_numbers<[1], [0], [0], [1], [0, 0, 1, 1], [], []>} : vector<128x128xbf16>, vector<128x128xbf16>, vector<128x128xf32> -> vector<128x128xf32>
    %c0_9 = arith.constant 0 : index
    %c0_10 = arith.constant 0 : index
    %11 = vector.load %arg6[%c0_9, %c0_10] : memref<1x128xf32, #tpu.memory_space<vmem>>, vector<1x128xf32>
    %12 = vector.broadcast %11 : vector<1x128xf32> to vector<128x128xf32>
    %13 = arith.addf %10, %12 : vector<128x128xf32>
    %cst_11 = arith.constant 5.000000e-01 : f32
    %14 = vector.broadcast %cst_11 : f32 to vector<128x128xf32>
    %15 = arith.mulf %14, %13 : vector<128x128xf32>
    %cst_12 = arith.constant 0.707106769 : f32
    %16 = vector.broadcast %cst_12 : f32 to vector<128x128xf32>
    %17 = arith.mulf %13, %16 : vector<128x128xf32>
    %18 = math.erf %17 : vector<128x128xf32>
    %cst_13 = arith.constant 1.000000e+00 : f32
    %19 = vector.broadcast %cst_13 : f32 to vector<128x128xf32>
    %20 = arith.addf %19, %18 : vector<128x128xf32>
    %21 = arith.mulf %15, %20 : vector<128x128xf32>
    %22 = arith.mulf %8, %21 : vector<128x128xf32>
    %c0_14 = arith.constant 0 : index
    %c0_15 = arith.constant 0 : index
    %23 = vector.load %arg10[%c0_14, %c0_15] : memref<128x128xf32, #tpu.memory_space<vmem>>, vector<128x128xf32>
    %24 = arith.truncf %22 : vector<128x128xf32> to vector<128x128xbf16>
    %c0_16 = arith.constant 0 : index
    %c0_17 = arith.constant 0 : index
    %25 = vector.load %arg7[%c0_16, %c0_17] : memref<128x128xbf16, #tpu.memory_space<vmem>>, vector<128x128xbf16>
    %cst_18 = arith.constant dense<0.000000e+00> : vector<128x128xf32>
    %26 = tpu.matmul %24, %25, %cst_18 {dimension_numbers = #tpu.dot_dimension_numbers<[1], [0], [0], [1], [0, 0, 1, 1], [], []>} : vector<128x128xbf16>, vector<128x128xbf16>, vector<128x128xf32> -> vector<128x128xf32>
    %27 = arith.addf %23, %26 : vector<128x128xf32>
    %c0_19 = arith.constant 0 : index
    %c0_20 = arith.constant 0 : index
    %28 = vector.load %arg10[%c0_19, %c0_20] : memref<128x128xf32, #tpu.memory_space<vmem>>, vector<128x128xf32>
    tpu.vector_store %arg10[%c0_19, %c0_20], %27 {strides = array<i32>} : memref<128x128xf32, #tpu.memory_space<vmem>>, vector<128x128xf32>,
    %c0_i32_21 = arith.constant 0 : i32
    %29 = arith.cmpi eq, %arg1, %c0_i32_21 : i32
    %30 = arith.extui %29 : i1 to i32
    %c0_i32_22 = arith.constant 0 : i32
    %31 = arith.cmpi ne, %30, %c0_i32_22 : i32
    scf.if %31 {
      %c0_23 = arith.constant 0 : index
      %c0_24 = arith.constant 0 : index
      %32 = vector.load %arg10[%c0_23, %c0_24] : memref<128x128xf32, #tpu.memory_space<vmem>>, vector<128x128xf32>
      %c0_25 = arith.constant 0 : index
      %c0_26 = arith.constant 0 : index
      %33 = vector.load %arg8[%c0_25, %c0_26] : memref<1x128xf32, #tpu.memory_space<vmem>>, vector<1x128xf32>
      %34 = vector.broadcast %33 : vector<1x128xf32> to vector<128x128xf32>
      %35 = arith.addf %32, %34 : vector<128x128xf32>
      %c0_27 = arith.constant 0 : index
      %c0_28 = arith.constant 0 : index
      %36 = vector.load %arg9[%c0_27, %c0_28] : memref<128x128xf32, #tpu.memory_space<vmem>>, vector<128x128xf32>
      tpu.vector_store %arg9[%c0_27, %c0_28], %35 {strides = array<i32>} : memref<128x128xf32, #tpu.memory_space<vmem>>, vector<128x128xf32>,
    } else {
    }
    return
  }
  func.func @transform_0(%arg0: i32, %arg1: i32) -> (i32, i32) {
    %c0_i32 = arith.constant 0 : i32
    %c0_i32_0 = arith.constant 0 : i32
    return %arg0, %c0_i32 : i32, i32
  }
  func.func @transform_1(%arg0: i32, %arg1: i32) -> (i32, i32) {
    %c0_i32 = arith.constant 0 : i32
    %c0_i32_0 = arith.constant 0 : i32
    return %c0_i32, %arg1 : i32, i32
  }
  func.func @transform_2(%arg0: i32, %arg1: i32) -> (i32, i32) {
    %c0_i32 = arith.constant 0 : i32
    %c0_i32_0 = arith.constant 0 : i32
    return %c0_i32, %arg1 : i32, i32
  }
  func.func @transform_3(%arg0: i32, %arg1: i32) -> (i32, i32) {
    %c0_i32 = arith.constant 0 : i32
    %c0_i32_0 = arith.constant 0 : i32
    return %c0_i32, %arg1 : i32, i32
  }
  func.func @transform_4(%arg0: i32, %arg1: i32) -> (i32, i32) {
    %c0_i32 = arith.constant 0 : i32
    %c0_i32_0 = arith.constant 0 : i32
    return %c0_i32, %arg1 : i32, i32
  }
  func.func @transform_5(%arg0: i32, %arg1: i32) -> (i32, i32) {
    %c0_i32 = arith.constant 0 : i32
    %c0_i32_0 = arith.constant 0 : i32
    return %arg1, %c0_i32 : i32, i32
  }
  func.func @transform_6(%arg0: i32, %arg1: i32) -> (i32, i32) {
    %c0_i32 = arith.constant 0 : i32
    %c0_i32_0 = arith.constant 0 : i32
    %c0_i32_1 = arith.constant 0 : i32
    return %c0_i32, %c0_i32_0 : i32, i32
  }
  func.func @transform_7(%arg0: i32, %arg1: i32) -> (i32, i32) {
    %c0_i32 = arith.constant 0 : i32
    %c0_i32_0 = arith.constant 0 : i32
    return %arg0, %c0_i32 : i32, i32
  }
}

</mosaic_0001>

<llo_original>
// kernel: tpu_custom_call.1
$region0: #{tpu_custom_call.1}
  #allocation0 [shape = 'u32[]', space=smem, size = 0x4, offset = 0x4, fixed_abs, tag = 'smem constant byte address 0x4 - core index']
  #allocation1 [shape = 'u32[144,128]{1,0:T(1,128)}', space=vmem, size = 0x12000, scoped, tag = 'internal scratch']
  #allocation2 [shape = 'f32[128,128]{1,0:T(8,128)}', space=vmem, size = 0x10000, scoped, tag = 'scratch operand']
  %s0 = inlined_call_operand.hbm [shape: bf16[128,128], index: 0, kind: input, shape index: {}]
  %s1 = inlined_call_operand.hbm [shape: bf16[128,128], index: 1, kind: input, shape index: {}]
  %s2 = inlined_call_operand.hbm [shape: bf16[128,128], index: 2, kind: input, shape index: {}]
  %s3 = inlined_call_operand.vmem [shape: f32[1,128], index: 3, kind: input, shape index: {}]
  %s4 = inlined_call_operand.vmem [shape: f32[1,128], index: 4, kind: input, shape index: {}]
  %s5 = inlined_call_operand.hbm [shape: bf16[128,128], index: 5, kind: input, shape index: {}]
  %s6 = inlined_call_operand.vmem [shape: f32[1,128], index: 6, kind: input, shape index: {}]
  %s7 = inlined_call_operand.hbm [shape: f32[128,128], index: 7, kind: output, shape index: {}]
  %s8 = sld [smem:[#allocation0]]
  $region62: #{tpu_custom_call.1} parent=0
    _
  %s10 = ssub.s32 1, %s8
  %s11 = scalar_select 0, %s10, %s8
  $region1: #{tpu_custom_call.1} parent=0
    #allocation3 [shape = 'u8[32768]{0}', space=vmem, size = 0x8000, scoped, tag = 'input window, operand 0, single buffered']
    #allocation4 [shape = 's32[1]{0}', space=sflag, size = 0x4, scoped, tag = 'scoped memory for tpu_custom_call.1']
    #allocation5 [shape = 's32[1]{0}', space=sflag, size = 0x4, scoped, tag = 'scoped memory for tpu_custom_call.1']
    #allocation6 [shape = 'u8[32768]{0}', space=vmem, size = 0x8000, scoped, tag = 'input window, operand 1, single buffered']
    #allocation7 [shape = 's32[1]{0}', space=sflag, size = 0x4, scoped, tag = 'scoped memory for tpu_custom_call.1']
    #allocation8 [shape = 'u8[32768]{0}', space=vmem, size = 0x8000, scoped, tag = 'input window, operand 2, single buffered']
    #allocation9 [shape = 'u8[32768]{0}', space=vmem, size = 0x8000, scoped, tag = 'input window, operand 5, single buffered']
    #allocation10 [shape = 's32[1]{0}', space=sflag, size = 0x4, scoped, tag = 'scoped memory for tpu_custom_call.1']
    #allocation11 [shape = 'u8[65536]{0}', space=vmem, size = 0x10000, scoped, tag = 'output window, operand 0, single buffered']
    %12 = vsyncpa [#allocation4], 0
    %13 = vsyncpa [#allocation7], 0
    %14 = vsyncpa [#allocation10], 0
    %15 = vsyncpa [#allocation5], 0
    // Predicated region
    $region2: #{tpu_custom_call.1} parent=1 // pred_check
      _
    $region3: #{tpu_custom_call.1} parent=1 // pred_check_branch
      %17 = sbr.rel (0) target = $region5
    $region4: #{tpu_custom_call.1} parent=1 // pred_region
      %s19 = ssub.s32 1024, 1024
      %20 = vsyncadd [#allocation4], %s19
      %s21 = sshll.u32 [#allocation3], 4
      %s22 = int_to_ptr.vmem [resolvable:$true] %s21
      %27 = dma.hbm_to_vmem [thread:$0]  %s0, 1024, %s22, [#allocation4], 64, 64, 4
    $region5: #{tpu_custom_call.1} parent=1 // pred_fallthru
      _
    // Predicated region
    $region6: #{tpu_custom_call.1} parent=1 // pred_check
      _
    $region7: #{tpu_custom_call.1} parent=1 // pred_check_branch
      %29 = sbr.rel (0) target = $region9
    $region8: #{tpu_custom_call.1} parent=1 // pred_region
      %s31 = ssub.s32 1024, 1024
      %32 = vsyncadd [#allocation7], %s31
      %s33 = sshll.u32 [#allocation6], 4
      %s34 = int_to_ptr.vmem [resolvable:$true] %s33
      %39 = dma.hbm_to_vmem [thread:$0]  %s1, 1024, %s34, [#allocation7], 64, 64, 4
    $region9: #{tpu_custom_call.1} parent=1 // pred_fallthru
      _
    // Predicated region
    $region10: #{tpu_custom_call.1} parent=1 // pred_check
      _
    $region11: #{tpu_custom_call.1} parent=1 // pred_check_branch
      %41 = sbr.rel (0) target = $region13
    $region12: #{tpu_custom_call.1} parent=1 // pred_region
      %s43 = ssub.s32 1024, 1024
      %44 = vsyncadd [#allocation7], %s43
      %s45 = sshll.u32 [#allocation8], 4
      %s46 = int_to_ptr.vmem [resolvable:$true] %s45
      %51 = dma.hbm_to_vmem [thread:$0]  %s2, 1024, %s46, [#allocation7], 64, 64, 4
    $region13: #{tpu_custom_call.1} parent=1 // pred_fallthru
      _
    // Predicated region
    $region14: #{tpu_custom_call.1} parent=1 // pred_check
      _
    $region15: #{tpu_custom_call.1} parent=1 // pred_check_branch
      %53 = sbr.rel (0) target = $region17
    $region16: #{tpu_custom_call.1} parent=1 // pred_region
      _
    $region17: #{tpu_custom_call.1} parent=1 // pred_fallthru
      _
    // Predicated region
    $region18: #{tpu_custom_call.1} parent=1 // pred_check
      _
    $region19: #{tpu_custom_call.1} parent=1 // pred_check_branch
      %55 = sbr.rel (0) target = $region21
    $region20: #{tpu_custom_call.1} parent=1 // pred_region
      _
    $region21: #{tpu_custom_call.1} parent=1 // pred_fallthru
      _
    // Predicated region
    $region22: #{tpu_custom_call.1} parent=1 // pred_check
      _
    $region23: #{tpu_custom_call.1} parent=1 // pred_check_branch
      %57 = sbr.rel (0) target = $region25
    $region24: #{tpu_custom_call.1} parent=1 // pred_region
      %s59 = ssub.s32 1024, 1024
      %60 = vsyncadd [#allocation10], %s59
      %s61 = sshll.u32 [#allocation9], 4
      %s62 = int_to_ptr.vmem [resolvable:$true] %s61
      %67 = dma.hbm_to_vmem [thread:$0]  %s5, 1024, %s62, [#allocation10], 64, 64, 4
    $region25: #{tpu_custom_call.1} parent=1 // pred_fallthru
      _
    // Predicated region
    $region26: #{tpu_custom_call.1} parent=1 // pred_check
      _
    $region27: #{tpu_custom_call.1} parent=1 // pred_check_branch
      %69 = sbr.rel (0) target = $region29
    $region28: #{tpu_custom_call.1} parent=1 // pred_region
      _
    $region29: #{tpu_custom_call.1} parent=1 // pred_fallthru
      _
    // Predicated region
    $region30: #{tpu_custom_call.1} parent=1 // pred_check
      _
    $region31: #{tpu_custom_call.1} parent=1 // pred_check_branch
      %71 = sbr.rel (0) target = $region33
    $region32: #{tpu_custom_call.1} parent=1 // pred_region
      %72 = dma.done [#allocation4], 1024
    $region33: #{tpu_custom_call.1} parent=1 // pred_fallthru
      _
    // Predicated region
    $region34: #{tpu_custom_call.1} parent=1 // pred_check
      _
    $region35: #{tpu_custom_call.1} parent=1 // pred_check_branch
      %74 = sbr.rel (0) target = $region37
    $region36: #{tpu_custom_call.1} parent=1 // pred_region
      %75 = dma.done [#allocation7], 1024
    $region37: #{tpu_custom_call.1} parent=1 // pred_fallthru
      _
    // Predicated region
    $region38: #{tpu_custom_call.1} parent=1 // pred_check
      _
    $region39: #{tpu_custom_call.1} parent=1 // pred_check_branch
      %77 = sbr.rel (0) target = $region41
    $region40: #{tpu_custom_call.1} parent=1 // pred_region
      %78 = dma.done [#allocation7], 1024
    $region41: #{tpu_custom_call.1} parent=1 // pred_fallthru
      _
    // Predicated region
    $region42: #{tpu_custom_call.1} parent=1 // pred_check
      _
    $region43: #{tpu_custom_call.1} parent=1 // pred_check_branch
      %80 = sbr.rel (0) target = $region45
    $region44: #{tpu_custom_call.1} parent=1 // pred_region
      %81 = dma.done [#allocation10], 1024
    $region45: #{tpu_custom_call.1} parent=1 // pred_fallthru
      _
    %p83 = scmp.eq.s32.totalorder 0, 0
    // Predicated region
    $region46: #{tpu_custom_call.1} parent=1 // pred_check
      %p84 = pneg %p83
    $region47: #{tpu_custom_call.1} parent=1 // pred_check_branch
      %86 = sbr.rel (%p84) target = $region49
    $region48: #{tpu_custom_call.1} parent=1 // pred_region
      %87 = vst [vmem:[#allocation2] sm:$0xff] 0.0
      %88 = vst [vmem:[#allocation2 + $0x8] sm:$0xff] 0.0
      %89 = vst [vmem:[#allocation2 + $0x10] sm:$0xff] 0.0
      %90 = vst [vmem:[#allocation2 + $0x18] sm:$0xff] 0.0
      %91 = vst [vmem:[#allocation2 + $0x20] sm:$0xff] 0.0
      %92 = vst [vmem:[#allocation2 + $0x28] sm:$0xff] 0.0
      %93 = vst [vmem:[#allocation2 + $0x30] sm:$0xff] 0.0
      %94 = vst [vmem:[#allocation2 + $0x38] sm:$0xff] 0.0
      %95 = vst [vmem:[#allocation2 + $0x40] sm:$0xff] 0.0
      %96 = vst [vmem:[#allocation2 + $0x48] sm:$0xff] 0.0
      %97 = vst [vmem:[#allocation2 + $0x50] sm:$0xff] 0.0
      %98 = vst [vmem:[#allocation2 + $0x58] sm:$0xff] 0.0
      %99 = vst [vmem:[#allocation2 + $0x60] sm:$0xff] 0.0
      %100 = vst [vmem:[#allocation2 + $0x68] sm:$0xff] 0.0
      %101 = vst [vmem:[#allocation2 + $0x70] sm:$0xff] 0.0
      %102 = vst [vmem:[#allocation2 + $0x78] sm:$0xff] 0.0
    $region49: #{tpu_custom_call.1} parent=1 // pred_fallthru
      _
    %v103 = vld [vmem:[#allocation3] sm:$0xf]
    %v104 = vld [vmem:[#allocation3 + $0x4] sm:$0xf]
    %v105 = vld [vmem:[#allocation3 + $0x8] sm:$0xf]
    %v106 = vld [vmem:[#allocation3 + $0xc] sm:$0xf]
    %v107 = vld [vmem:[#allocation3 + $0x10] sm:$0xf]
    %v108 = vld [vmem:[#allocation3 + $0x14] sm:$0xf]
    %v109 = vld [vmem:[#allocation3 + $0x18] sm:$0xf]
    %v110 = vld [vmem:[#allocation3 + $0x1c] sm:$0xf]
    %v111 = vld [vmem:[#allocation3 + $0x20] sm:$0xf]
    %v112 = vld [vmem:[#allocation3 + $0x24] sm:$0xf]
    %v113 = vld [vmem:[#allocation3 + $0x28] sm:$0xf]
    %v114 = vld [vmem:[#allocation3 + $0x2c] sm:$0xf]
    %v115 = vld [vmem:[#allocation3 + $0x30] sm:$0xf]
    %v116 = vld [vmem:[#allocation3 + $0x34] sm:$0xf]
    %v117 = vld [vmem:[#allocation3 + $0x38] sm:$0xf]
    %v118 = vld [vmem:[#allocation3 + $0x3c] sm:$0xf]
    %v119 = vld [vmem:[#allocation6] sm:$0xf]
    %v120 = vld [vmem:[#allocation6 + $0x4] sm:$0xf]
    %v121 = vld [vmem:[#allocation6 + $0x8] sm:$0xf]
    %v122 = vld [vmem:[#allocation6 + $0xc] sm:$0xf]
    %v123 = vld [vmem:[#allocation6 + $0x10] sm:$0xf]
    %v124 = vld [vmem:[#allocation6 + $0x14] sm:$0xf]
    %v125 = vld [vmem:[#allocation6 + $0x18] sm:$0xf]
    %v126 = vld [vmem:[#allocation6 + $0x1c] sm:$0xf]
    %v127 = vld [vmem:[#allocation6 + $0x20] sm:$0xf]
    %v128 = vld [vmem:[#allocation6 + $0x24] sm:$0xf]
    %v129 = vld [vmem:[#allocation6 + $0x28] sm:$0xf]
    %v130 = vld [vmem:[#allocation6 + $0x2c] sm:$0xf]
    %v131 = vld [vmem:[#allocation6 + $0x30] sm:$0xf]
    %v132 = vld [vmem:[#allocation6 + $0x34] sm:$0xf]
    %v133 = vld [vmem:[#allocation6 + $0x38] sm:$0xf]
    %v134 = vld [vmem:[#allocation6 + $0x3c] sm:$0xf]
    %v135 = vld [vmem:[%s3] sm:$0x1]
    %v137 = vlaneseq
    %v138 = vshrl.u32 %v137, 7
    %v139 = vsub.s32 0, %v138
    %v140 = vrot.slane %v135, %v139
    %v158 = vunpack.c.l.b16 %v103
    %v159 = vunpack.c.l.b16 %v104
    %v160 = vunpack.c.l.b16 %v105
    %v161 = vunpack.c.l.b16 %v106
    %v162 = vunpack.c.l.b16 %v107
    %v163 = vunpack.c.l.b16 %v108
    %v164 = vunpack.c.l.b16 %v109
    %v165 = vunpack.c.l.b16 %v110
    %v166 = vunpack.c.l.b16 %v111
    %v167 = vunpack.c.l.b16 %v112
    %v168 = vunpack.c.l.b16 %v113
    %v169 = vunpack.c.l.b16 %v114
    %v170 = vunpack.c.l.b16 %v115
    %v171 = vunpack.c.l.b16 %v116
    %v172 = vunpack.c.l.b16 %v117
    %v173 = vunpack.c.l.b16 %v118
    %v174 = vpack.c.b16 %v159, %v158
    %v175 = vpack.c.b16 %v161, %v160
    %v176 = vpack.c.b16 %v163, %v162
    %v177 = vpack.c.b16 %v165, %v164
    %v178 = vpack.c.b16 %v167, %v166
    %v179 = vpack.c.b16 %v169, %v168
    %v180 = vpack.c.b16 %v171, %v170
    %v181 = vpack.c.b16 %v173, %v172
    %v206 = vunpack.c.l.b16 %v119
    %v207 = vunpack.c.l.b16 %v120
    %v208 = vunpack.c.l.b16 %v121
    %v209 = vunpack.c.l.b16 %v122
    %v210 = vunpack.c.l.b16 %v123
    %v211 = vunpack.c.l.b16 %v124
    %v212 = vunpack.c.l.b16 %v125
    %v213 = vunpack.c.l.b16 %v126
    %v214 = vunpack.c.l.b16 %v127
    %v215 = vunpack.c.l.b16 %v128
    %v216 = vunpack.c.l.b16 %v129
    %v217 = vunpack.c.l.b16 %v130
    %v218 = vunpack.c.l.b16 %v131
    %v219 = vunpack.c.l.b16 %v132
    %v220 = vunpack.c.l.b16 %v133
    %v221 = vunpack.c.l.b16 %v134
    %v222 = vpack.c.b16 %v207, %v206
    %v223 = vpack.c.b16 %v209, %v208
    %v224 = vpack.c.b16 %v211, %v210
    %v225 = vpack.c.b16 %v213, %v212
    %v226 = vpack.c.b16 %v215, %v214
    %v227 = vpack.c.b16 %v217, %v216
    %v228 = vpack.c.b16 %v219, %v218
    %v229 = vpack.c.b16 %v221, %v220
    %238 = vmatprep.subr.bf16.mxu0 0
    %239 = vmatpush1.bf16.msra.mxu0 %v222
    %240 = vmatprep.subr.bf16.mxu0 0
    %241 = vmatpush1.bf16.msra.mxu0 %v223
    %242 = vmatprep.subr.bf16.mxu0 0
    %243 = vmatpush1.bf16.msra.mxu0 %v224
    %244 = vmatprep.subr.bf16.mxu0 0
    %245 = vmatpush1.bf16.msra.mxu0 %v225
    %246 = vmatprep.subr.bf16.mxu0 0
    %247 = vmatpush1.bf16.msra.mxu0 %v226
    %248 = vmatprep.subr.bf16.mxu0 0
    %249 = vmatpush1.bf16.msra.mxu0 %v227
    %250 = vmatprep.subr.bf16.mxu0 0
    %251 = vmatpush1.bf16.msra.mxu0 %v228
    %252 = vmatprep.subr.bf16.mxu0 0
    %253 = vmatpush1.bf16.msra.mxu0 %v229
    %254 = vmatprep.subr.bf16.mxu0 0
    %255 = vmatpush1.bf16.msra.mxu0 0
    %256 = vmatprep.subr.bf16.mxu0 0
    %257 = vmatpush1.bf16.msra.mxu0 0
    %258 = vmatprep.subr.bf16.mxu0 0
    %259 = vmatpush1.bf16.msra.mxu0 0
    %260 = vmatprep.subr.bf16.mxu0 0
    %261 = vmatpush1.bf16.msra.mxu0 0
    %262 = vmatprep.subr.bf16.mxu0 0
    %263 = vmatpush1.bf16.msra.mxu0 0
    %264 = vmatprep.subr.bf16.mxu0 0
    %265 = vmatpush1.bf16.msra.mxu0 0
    %266 = vmatprep.subr.bf16.mxu0 0
    %267 = vmatpush1.bf16.msra.mxu0 0
    %268 = vmatprep.subr.bf16.mxu0 0
    %269 = vmatpush1.bf16.msra.mxu0 0
    %270 = vmatprep.mubr.bf16.mxu0 0
    %271 = vmatmul.mubr.bf16.gmra.mrb[0].mxu0 %v174
    %v272 = vpop.f32.mrb[0].mxu0
    %v273 = vadd.f32 %v140, %v272
    %v274 = vpop.f32.mrb[0].mxu0
    %v275 = vpop.f32.mrb[0].mxu0
    %v276 = vadd.f32 %v140, %v275
    %v277 = vpop.f32.mrb[0].mxu0
    %278 = vmatprep.mubr.bf16.mxu0 0
    %279 = vmatmul.mubr.bf16.gmra.mrb[0].mxu0 %v175
    %v280 = vpop.f32.mrb[0].mxu0
    %v281 = vadd.f32 %v140, %v280
    %v282 = vpop.f32.mrb[0].mxu0
    %v283 = vpop.f32.mrb[0].mxu0
    %v284 = vadd.f32 %v140, %v283
    %v285 = vpop.f32.mrb[0].mxu0
    %286 = vmatprep.mubr.bf16.mxu0 0
    %287 = vmatmul.mubr.bf16.gmra.mrb[0].mxu0 %v176
    %v288 = vpop.f32.mrb[0].mxu0
    %v289 = vadd.f32 %v140, %v288
    %v290 = vpop.f32.mrb[0].mxu0
    %v291 = vpop.f32.mrb[0].mxu0
    %v292 = vadd.f32 %v140, %v291
    %v293 = vpop.f32.mrb[0].mxu0
    %294 = vmatprep.mubr.bf16.mxu0 0
    %295 = vmatmul.mubr.bf16.gmra.mrb[0].mxu0 %v177
    %v296 = vpop.f32.mrb[0].mxu0
    %v297 = vadd.f32 %v140, %v296
    %v298 = vpop.f32.mrb[0].mxu0
    %v299 = vpop.f32.mrb[0].mxu0
    %v300 = vadd.f32 %v140, %v299
    %v301 = vpop.f32.mrb[0].mxu0
    %302 = vmatprep.mubr.bf16.mxu0 0
    %303 = vmatmul.mubr.bf16.gmra.mrb[0].mxu0 %v178
    %v304 = vpop.f32.mrb[0].mxu0
    %v305 = vadd.f32 %v140, %v304
    %v306 = vpop.f32.mrb[0].mxu0
    %v307 = vpop.f32.mrb[0].mxu0
    %v308 = vadd.f32 %v140, %v307
    %v309 = vpop.f32.mrb[0].mxu0
    %310 = vmatprep.mubr.bf16.mxu0 0
    %311 = vmatmul.mubr.bf16.gmra.mrb[0].mxu0 %v179
    %v312 = vpop.f32.mrb[0].mxu0
    %v313 = vadd.f32 %v140, %v312
    %v314 = vpop.f32.mrb[0].mxu0
    %v315 = vpop.f32.mrb[0].mxu0
    %v316 = vadd.f32 %v140, %v315
    %v317 = vpop.f32.mrb[0].mxu0
    %318 = vmatprep.mubr.bf16.mxu0 0
    %319 = vmatmul.mubr.bf16.gmra.mrb[0].mxu0 %v180
    %v320 = vpop.f32.mrb[0].mxu0
    %v321 = vadd.f32 %v140, %v320
    %v322 = vpop.f32.mrb[0].mxu0
    %v323 = vpop.f32.mrb[0].mxu0
    %v324 = vadd.f32 %v140, %v323
    %v325 = vpop.f32.mrb[0].mxu0
    %326 = vmatprep.mubr.bf16.mxu0 0
    %327 = vmatmul.mubr.bf16.gmra.mrb[0].mxu0 %v181
    %v328 = vpop.f32.mrb[0].mxu0
    %v329 = vadd.f32 %v140, %v328
    %v330 = vpop.f32.mrb[0].mxu0
    %v331 = vpop.f32.mrb[0].mxu0
    %v332 = vadd.f32 %v140, %v331
    %v333 = vpop.f32.mrb[0].mxu0
    %334 = vdwg.mxu0
    %v335 = vld [vmem:[#allocation8] sm:$0xf]
    %v336 = vld [vmem:[#allocation8 + $0x4] sm:$0xf]
    %v337 = vld [vmem:[#allocation8 + $0x8] sm:$0xf]
    %v338 = vld [vmem:[#allocation8 + $0xc] sm:$0xf]
    %v339 = vld [vmem:[#allocation8 + $0x10] sm:$0xf]
    %v340 = vld [vmem:[#allocation8 + $0x14] sm:$0xf]
    %v341 = vld [vmem:[#allocation8 + $0x18] sm:$0xf]
    %v342 = vld [vmem:[#allocation8 + $0x1c] sm:$0xf]
    %v343 = vld [vmem:[#allocation8 + $0x20] sm:$0xf]
    %v344 = vld [vmem:[#allocation8 + $0x24] sm:$0xf]
    %v345 = vld [vmem:[#allocation8 + $0x28] sm:$0xf]
    %v346 = vld [vmem:[#allocation8 + $0x2c] sm:$0xf]
    %v347 = vld [vmem:[#allocation8 + $0x30] sm:$0xf]
    %v348 = vld [vmem:[#allocation8 + $0x34] sm:$0xf]
    %v349 = vld [vmem:[#allocation8 + $0x38] sm:$0xf]
    %v350 = vld [vmem:[#allocation8 + $0x3c] sm:$0xf]
    %v351 = vld [vmem:[%s4] sm:$0x1]
    %v353 = vlaneseq
    %v354 = vshrl.u32 %v353, 7
    %v355 = vsub.s32 0, %v354
    %v356 = vrot.slane %v351, %v355
    %v374 = vunpack.c.l.b16 %v335
    %v375 = vunpack.c.l.b16 %v336
    %v376 = vunpack.c.l.b16 %v337
    %v377 = vunpack.c.l.b16 %v338
    %v378 = vunpack.c.l.b16 %v339
    %v379 = vunpack.c.l.b16 %v340
    %v380 = vunpack.c.l.b16 %v341
    %v381 = vunpack.c.l.b16 %v342
    %v382 = vunpack.c.l.b16 %v343
    %v383 = vunpack.c.l.b16 %v344
    %v384 = vunpack.c.l.b16 %v345
    %v385 = vunpack.c.l.b16 %v346
    %v386 = vunpack.c.l.b16 %v347
    %v387 = vunpack.c.l.b16 %v348
    %v388 = vunpack.c.l.b16 %v349
    %v389 = vunpack.c.l.b16 %v350
    %v390 = vpack.c.b16 %v375, %v374
    %v391 = vpack.c.b16 %v377, %v376
    %v392 = vpack.c.b16 %v379, %v378
    %v393 = vpack.c.b16 %v381, %v380
    %v394 = vpack.c.b16 %v383, %v382
    %v395 = vpack.c.b16 %v385, %v384
    %v396 = vpack.c.b16 %v387, %v386
    %v397 = vpack.c.b16 %v389, %v388
    %406 = vmatprep.subr.bf16.mxu0 0
    %407 = vmatpush1.bf16.msra.mxu0 %v390
    %408 = vmatprep.subr.bf16.mxu0 0
    %409 = vmatpush1.bf16.msra.mxu0 %v391
    %410 = vmatprep.subr.bf16.mxu0 0
    %411 = vmatpush1.bf16.msra.mxu0 %v392
    %412 = vmatprep.subr.bf16.mxu0 0
    %413 = vmatpush1.bf16.msra.mxu0 %v393
    %414 = vmatprep.subr.bf16.mxu0 0
    %415 = vmatpush1.bf16.msra.mxu0 %v394
    %416 = vmatprep.subr.bf16.mxu0 0
    %417 = vmatpush1.bf16.msra.mxu0 %v395
    %418 = vmatprep.subr.bf16.mxu0 0
    %419 = vmatpush1.bf16.msra.mxu0 %v396
    %420 = vmatprep.subr.bf16.mxu0 0
    %421 = vmatpush1.bf16.msra.mxu0 %v397
    %422 = vmatprep.subr.bf16.mxu0 0
    %423 = vmatpush1.bf16.msra.mxu0 0
    %424 = vmatprep.subr.bf16.mxu0 0
    %425 = vmatpush1.bf16.msra.mxu0 0
    %426 = vmatprep.subr.bf16.mxu0 0
    %427 = vmatpush1.bf16.msra.mxu0 0
    %428 = vmatprep.subr.bf16.mxu0 0
    %429 = vmatpush1.bf16.msra.mxu0 0
    %430 = vmatprep.subr.bf16.mxu0 0
    %431 = vmatpush1.bf16.msra.mxu0 0
    %432 = vmatprep.subr.bf16.mxu0 0
    %433 = vmatpush1.bf16.msra.mxu0 0
    %434 = vmatprep.subr.bf16.mxu0 0
    %435 = vmatpush1.bf16.msra.mxu0 0
    %436 = vmatprep.subr.bf16.mxu0 0
    %437 = vmatpush1.bf16.msra.mxu0 0
    %438 = vmatprep.mubr.bf16.mxu0 0
    %439 = vmatmul.mubr.bf16.gmra.mrb[0].mxu0 %v174
    %v440 = vpop.f32.mrb[0].mxu0
    %v441 = vadd.f32 %v356, %v440
    %v442 = vpop.f32.mrb[0].mxu0
    %v443 = vpop.f32.mrb[0].mxu0
    %v444 = vadd.f32 %v356, %v443
    %v445 = vpop.f32.mrb[0].mxu0
    %446 = vmatprep.mubr.bf16.mxu0 0
    %447 = vmatmul.mubr.bf16.gmra.mrb[0].mxu0 %v175
    %v448 = vpop.f32.mrb[0].mxu0
    %v449 = vadd.f32 %v356, %v448
    %v450 = vpop.f32.mrb[0].mxu0
    %v451 = vpop.f32.mrb[0].mxu0
    %v452 = vadd.f32 %v356, %v451
    %v453 = vpop.f32.mrb[0].mxu0
    %454 = vmatprep.mubr.bf16.mxu0 0
    %455 = vmatmul.mubr.bf16.gmra.mrb[0].mxu0 %v176
    %v456 = vpop.f32.mrb[0].mxu0
    %v457 = vadd.f32 %v356, %v456
    %v458 = vpop.f32.mrb[0].mxu0
    %v459 = vpop.f32.mrb[0].mxu0
    %v460 = vadd.f32 %v356, %v459
    %v461 = vpop.f32.mrb[0].mxu0
    %462 = vmatprep.mubr.bf16.mxu0 0
    %463 = vmatmul.mubr.bf16.gmra.mrb[0].mxu0 %v177
    %v464 = vpop.f32.mrb[0].mxu0
    %v465 = vadd.f32 %v356, %v464
    %v466 = vpop.f32.mrb[0].mxu0
    %v467 = vpop.f32.mrb[0].mxu0
    %v468 = vadd.f32 %v356, %v467
    %v469 = vpop.f32.mrb[0].mxu0
    %470 = vmatprep.mubr.bf16.mxu0 0
    %471 = vmatmul.mubr.bf16.gmra.mrb[0].mxu0 %v178
    %v472 = vpop.f32.mrb[0].mxu0
    %v473 = vadd.f32 %v356, %v472
    %v474 = vpop.f32.mrb[0].mxu0
    %v475 = vpop.f32.mrb[0].mxu0
    %v476 = vadd.f32 %v356, %v475
    %v477 = vpop.f32.mrb[0].mxu0
    %478 = vmatprep.mubr.bf16.mxu0 0
    %479 = vmatmul.mubr.bf16.gmra.mrb[0].mxu0 %v179
    %v480 = vpop.f32.mrb[0].mxu0
    %v481 = vadd.f32 %v356, %v480
    %v482 = vpop.f32.mrb[0].mxu0
    %v483 = vpop.f32.mrb[0].mxu0
    %v484 = vadd.f32 %v356, %v483
    %v485 = vpop.f32.mrb[0].mxu0
    %486 = vmatprep.mubr.bf16.mxu0 0
    %487 = vmatmul.mubr.bf16.gmra.mrb[0].mxu0 %v180
    %v488 = vpop.f32.mrb[0].mxu0
    %v489 = vadd.f32 %v356, %v488
    %v490 = vpop.f32.mrb[0].mxu0
    %v491 = vpop.f32.mrb[0].mxu0
    %v492 = vadd.f32 %v356, %v491
    %v493 = vpop.f32.mrb[0].mxu0
    %494 = vmatprep.mubr.bf16.mxu0 0
    %495 = vmatmul.mubr.bf16.gmra.mrb[0].mxu0 %v181
    %v496 = vpop.f32.mrb[0].mxu0
    %v497 = vadd.f32 %v356, %v496
    %v498 = vpop.f32.mrb[0].mxu0
    %v499 = vpop.f32.mrb[0].mxu0
    %v500 = vadd.f32 %v356, %v499
    %v501 = vpop.f32.mrb[0].mxu0
    %502 = vdwg.mxu0
    %v503 = vmul.f32 %v441, 0.5
    %v504 = vmul.f32 %v444, 0.5
    %v505 = vmul.f32 %v449, 0.5
    %v506 = vmul.f32 %v452, 0.5
    %v507 = vmul.f32 %v457, 0.5
    %v508 = vmul.f32 %v460, 0.5
    %v509 = vmul.f32 %v465, 0.5
    %v510 = vmul.f32 %v468, 0.5
    %v511 = vmul.f32 %v473, 0.5
    %v512 = vmul.f32 %v476, 0.5
    %v513 = vmul.f32 %v481, 0.5
    %v514 = vmul.f32 %v484, 0.5
    %v515 = vmul.f32 %v489, 0.5
    %v516 = vmul.f32 %v492, 0.5
    %v517 = vmul.f32 %v497, 0.5
    %v518 = vmul.f32 %v500, 0.5
    %v519 = vmul.f32 %v441, 0.70710677
    %v520 = vmul.f32 %v444, 0.70710677
    %v521 = vmul.f32 %v449, 0.70710677
    %v522 = vmul.f32 %v452, 0.70710677
    %v523 = vmul.f32 %v457, 0.70710677
    %v524 = vmul.f32 %v460, 0.70710677
    %v525 = vmul.f32 %v465, 0.70710677
    %v526 = vmul.f32 %v468, 0.70710677
    %v527 = vmul.f32 %v473, 0.70710677
    %v528 = vmul.f32 %v476, 0.70710677
    %v529 = vmul.f32 %v481, 0.70710677
    %v530 = vmul.f32 %v484, 0.70710677
    %v531 = vmul.f32 %v489, 0.70710677
    %v532 = vmul.f32 %v492, 0.70710677
    %v533 = vmul.f32 %v497, 0.70710677
    %v534 = vmul.f32 %v500, 0.70710677
    %v535 = verf.f32.pop %v519
    %v536 = verf.f32.pop %v520
    %v537 = verf.f32.pop %v521
    %v538 = verf.f32.pop %v522
    %v539 = verf.f32.pop %v523
    %v540 = verf.f32.pop %v524
    %v541 = verf.f32.pop %v525
    %v542 = verf.f32.pop %v526
    %v543 = verf.f32.pop %v527
    %v544 = verf.f32.pop %v528
    %v545 = verf.f32.pop %v529
    %v546 = verf.f32.pop %v530
    %v547 = verf.f32.pop %v531
    %v548 = verf.f32.pop %v532
    %v549 = verf.f32.pop %v533
    %v550 = verf.f32.pop %v534
    %v551 = vadd.f32 %v535, 1.0
    %v552 = vadd.f32 %v536, 1.0
    %v553 = vadd.f32 %v537, 1.0
    %v554 = vadd.f32 %v538, 1.0
    %v555 = vadd.f32 %v539, 1.0
    %v556 = vadd.f32 %v540, 1.0
    %v557 = vadd.f32 %v541, 1.0
    %v558 = vadd.f32 %v542, 1.0
    %v559 = vadd.f32 %v543, 1.0
    %v560 = vadd.f32 %v544, 1.0
    %v561 = vadd.f32 %v545, 1.0
    %v562 = vadd.f32 %v546, 1.0
    %v563 = vadd.f32 %v547, 1.0
    %v564 = vadd.f32 %v548, 1.0
    %v565 = vadd.f32 %v549, 1.0
    %v566 = vadd.f32 %v550, 1.0
    %v567 = vmul.f32 %v503, %v551
    %v568 = vmul.f32 %v504, %v552
    %v569 = vmul.f32 %v505, %v553
    %v570 = vmul.f32 %v506, %v554
    %v571 = vmul.f32 %v507, %v555
    %v572 = vmul.f32 %v508, %v556
    %v573 = vmul.f32 %v509, %v557
    %v574 = vmul.f32 %v510, %v558
    %v575 = vmul.f32 %v511, %v559
    %v576 = vmul.f32 %v512, %v560
    %v577 = vmul.f32 %v513, %v561
    %v578 = vmul.f32 %v514, %v562
    %v579 = vmul.f32 %v515, %v563
    %v580 = vmul.f32 %v516, %v564
    %v581 = vmul.f32 %v517, %v565
    %v582 = vmul.f32 %v518, %v566
    %v583 = vmul.f32 %v273, %v567
    %v584 = vmul.f32 %v276, %v568
    %v585 = vmul.f32 %v281, %v569
    %v586 = vmul.f32 %v284, %v570
    %v587 = vmul.f32 %v289, %v571
    %v588 = vmul.f32 %v292, %v572
    %v589 = vmul.f32 %v297, %v573
    %v590 = vmul.f32 %v300, %v574
    %v591 = vmul.f32 %v305, %v575
    %v592 = vmul.f32 %v308, %v576
    %v593 = vmul.f32 %v313, %v577
    %v594 = vmul.f32 %v316, %v578
    %v595 = vmul.f32 %v321, %v579
    %v596 = vmul.f32 %v324, %v580
    %v597 = vmul.f32 %v329, %v581
    %v598 = vmul.f32 %v332, %v582
    %v599 = vld [vmem:[#allocation2] sm:$0xff]
    %v600 = vld [vmem:[#allocation2 + $0x8] sm:$0xff]
    %v601 = vld [vmem:[#allocation2 + $0x10] sm:$0xff]
    %v602 = vld [vmem:[#allocation2 + $0x18] sm:$0xff]
    %v603 = vld [vmem:[#allocation2 + $0x20] sm:$0xff]
    %v604 = vld [vmem:[#allocation2 + $0x28] sm:$0xff]
    %v605 = vld [vmem:[#allocation2 + $0x30] sm:$0xff]
    %v606 = vld [vmem:[#allocation2 + $0x38] sm:$0xff]
    %v607 = vld [vmem:[#allocation2 + $0x40] sm:$0xff]
    %v608 = vld [vmem:[#allocation2 + $0x48] sm:$0xff]
    %v609 = vld [vmem:[#allocation2 + $0x50] sm:$0xff]
    %v610 = vld [vmem:[#allocation2 + $0x58] sm:$0xff]
    %v611 = vld [vmem:[#allocation2 + $0x60] sm:$0xff]
    %v612 = vld [vmem:[#allocation2 + $0x68] sm:$0xff]
    %v613 = vld [vmem:[#allocation2 + $0x70] sm:$0xff]
    %v614 = vld [vmem:[#allocation2 + $0x78] sm:$0xff]
    %v615 = vpack.c.bf16 %v584, %v583
    %v616 = vpack.c.bf16 %v586, %v585
    %v617 = vpack.c.bf16 %v588, %v587
    %v618 = vpack.c.bf16 %v590, %v589
    %v619 = vpack.c.bf16 %v592, %v591
    %v620 = vpack.c.bf16 %v594, %v593
    %v621 = vpack.c.bf16 %v596, %v595
    %v622 = vpack.c.bf16 %v598, %v597
    %v623 = vld [vmem:[#allocation9] sm:$0xf]
    %v624 = vld [vmem:[#allocation9 + $0x4] sm:$0xf]
    %v625 = vld [vmem:[#allocation9 + $0x8] sm:$0xf]
    %v626 = vld [vmem:[#allocation9 + $0xc] sm:$0xf]
    %v627 = vld [vmem:[#allocation9 + $0x10] sm:$0xf]
    %v628 = vld [vmem:[#allocation9 + $0x14] sm:$0xf]
    %v629 = vld [vmem:[#allocation9 + $0x18] sm:$0xf]
    %v630 = vld [vmem:[#allocation9 + $0x1c] sm:$0xf]
    %v631 = vld [vmem:[#allocation9 + $0x20] sm:$0xf]
    %v632 = vld [vmem:[#allocation9 + $0x24] sm:$0xf]
    %v633 = vld [vmem:[#allocation9 + $0x28] sm:$0xf]
    %v634 = vld [vmem:[#allocation9 + $0x2c] sm:$0xf]
    %v635 = vld [vmem:[#allocation9 + $0x30] sm:$0xf]
    %v636 = vld [vmem:[#allocation9 + $0x34] sm:$0xf]
    %v637 = vld [vmem:[#allocation9 + $0x38] sm:$0xf]
    %v638 = vld [vmem:[#allocation9 + $0x3c] sm:$0xf]
    %v655 = vunpack.c.l.b16 %v623
    %v656 = vunpack.c.l.b16 %v624
    %v657 = vunpack.c.l.b16 %v625
    %v658 = vunpack.c.l.b16 %v626
    %v659 = vunpack.c.l.b16 %v627
    %v660 = vunpack.c.l.b16 %v628
    %v661 = vunpack.c.l.b16 %v629
    %v662 = vunpack.c.l.b16 %v630
    %v663 = vunpack.c.l.b16 %v631
    %v664 = vunpack.c.l.b16 %v632
    %v665 = vunpack.c.l.b16 %v633
    %v666 = vunpack.c.l.b16 %v634
    %v667 = vunpack.c.l.b16 %v635
    %v668 = vunpack.c.l.b16 %v636
    %v669 = vunpack.c.l.b16 %v637
    %v670 = vunpack.c.l.b16 %v638
    %v671 = vpack.c.b16 %v656, %v655
    %v672 = vpack.c.b16 %v658, %v657
    %v673 = vpack.c.b16 %v660, %v659
    %v674 = vpack.c.b16 %v662, %v661
    %v675 = vpack.c.b16 %v664, %v663
    %v676 = vpack.c.b16 %v666, %v665
    %v677 = vpack.c.b16 %v668, %v667
    %v678 = vpack.c.b16 %v670, %v669
    %687 = vmatprep.subr.bf16.mxu0 0
    %688 = vmatpush1.bf16.msra.mxu0 %v671
    %689 = vmatprep.subr.bf16.mxu0 0
    %690 = vmatpush1.bf16.msra.mxu0 %v672
    %691 = vmatprep.subr.bf16.mxu0 0
    %692 = vmatpush1.bf16.msra.mxu0 %v673
    %693 = vmatprep.subr.bf16.mxu0 0
    %694 = vmatpush1.bf16.msra.mxu0 %v674
    %695 = vmatprep.subr.bf16.mxu0 0
    %696 = vmatpush1.bf16.msra.mxu0 %v675
    %697 = vmatprep.subr.bf16.mxu0 0
    %698 = vmatpush1.bf16.msra.mxu0 %v676
    %699 = vmatprep.subr.bf16.mxu0 0
    %700 = vmatpush1.bf16.msra.mxu0 %v677
    %701 = vmatprep.subr.bf16.mxu0 0
    %702 = vmatpush1.bf16.msra.mxu0 %v678
    %703 = vmatprep.subr.bf16.mxu0 0
    %704 = vmatpush1.bf16.msra.mxu0 0
    %705 = vmatprep.subr.bf16.mxu0 0
    %706 = vmatpush1.bf16.msra.mxu0 0
    %707 = vmatprep.subr.bf16.mxu0 0
    %708 = vmatpush1.bf16.msra.mxu0 0
    %709 = vmatprep.subr.bf16.mxu0 0
    %710 = vmatpush1.bf16.msra.mxu0 0
    %711 = vmatprep.subr.bf16.mxu0 0
    %712 = vmatpush1.bf16.msra.mxu0 0
    %713 = vmatprep.subr.bf16.mxu0 0
    %714 = vmatpush1.bf16.msra.mxu0 0
    %715 = vmatprep.subr.bf16.mxu0 0
    %716 = vmatpush1.bf16.msra.mxu0 0
    %717 = vmatprep.subr.bf16.mxu0 0
    %718 = vmatpush1.bf16.msra.mxu0 0
    %719 = vmatprep.mubr.bf16.mxu0 0
    %720 = vmatmul.mubr.bf16.gmra.mrb[0].mxu0 %v615
    %v721 = vpop.f32.mrb[0].mxu0
    %v722 = vadd.f32 0.0, %v721
    %v723 = vpop.f32.mrb[0].mxu0
    %v724 = vpop.f32.mrb[0].mxu0
    %v725 = vadd.f32 0.0, %v724
    %v726 = vpop.f32.mrb[0].mxu0
    %727 = vmatprep.mubr.bf16.mxu0 0
    %728 = vmatmul.mubr.bf16.gmra.mrb[0].mxu0 %v616
    %v729 = vpop.f32.mrb[0].mxu0
    %v730 = vadd.f32 0.0, %v729
    %v731 = vpop.f32.mrb[0].mxu0
    %v732 = vpop.f32.mrb[0].mxu0
    %v733 = vadd.f32 0.0, %v732
    %v734 = vpop.f32.mrb[0].mxu0
    %735 = vmatprep.mubr.bf16.mxu0 0
    %736 = vmatmul.mubr.bf16.gmra.mrb[0].mxu0 %v617
    %v737 = vpop.f32.mrb[0].mxu0
    %v738 = vadd.f32 0.0, %v737
    %v739 = vpop.f32.mrb[0].mxu0
    %v740 = vpop.f32.mrb[0].mxu0
    %v741 = vadd.f32 0.0, %v740
    %v742 = vpop.f32.mrb[0].mxu0
    %743 = vmatprep.mubr.bf16.mxu0 0
    %744 = vmatmul.mubr.bf16.gmra.mrb[0].mxu0 %v618
    %v745 = vpop.f32.mrb[0].mxu0
    %v746 = vadd.f32 0.0, %v745
    %v747 = vpop.f32.mrb[0].mxu0
    %v748 = vpop.f32.mrb[0].mxu0
    %v749 = vadd.f32 0.0, %v748
    %v750 = vpop.f32.mrb[0].mxu0
    %751 = vmatprep.mubr.bf16.mxu0 0
    %752 = vmatmul.mubr.bf16.gmra.mrb[0].mxu0 %v619
    %v753 = vpop.f32.mrb[0].mxu0
    %v754 = vadd.f32 0.0, %v753
    %v755 = vpop.f32.mrb[0].mxu0
    %v756 = vpop.f32.mrb[0].mxu0
    %v757 = vadd.f32 0.0, %v756
    %v758 = vpop.f32.mrb[0].mxu0
    %759 = vmatprep.mubr.bf16.mxu0 0
    %760 = vmatmul.mubr.bf16.gmra.mrb[0].mxu0 %v620
    %v761 = vpop.f32.mrb[0].mxu0
    %v762 = vadd.f32 0.0, %v761
    %v763 = vpop.f32.mrb[0].mxu0
    %v764 = vpop.f32.mrb[0].mxu0
    %v765 = vadd.f32 0.0, %v764
    %v766 = vpop.f32.mrb[0].mxu0
    %767 = vmatprep.mubr.bf16.mxu0 0
    %768 = vmatmul.mubr.bf16.gmra.mrb[0].mxu0 %v621
    %v769 = vpop.f32.mrb[0].mxu0
    %v770 = vadd.f32 0.0, %v769
    %v771 = vpop.f32.mrb[0].mxu0
    %v772 = vpop.f32.mrb[0].mxu0
    %v773 = vadd.f32 0.0, %v772
    %v774 = vpop.f32.mrb[0].mxu0
    %775 = vmatprep.mubr.bf16.mxu0 0
    %776 = vmatmul.mubr.bf16.gmra.mrb[0].mxu0 %v622
    %v777 = vpop.f32.mrb[0].mxu0
    %v778 = vadd.f32 0.0, %v777
    %v779 = vpop.f32.mrb[0].mxu0
    %v780 = vpop.f32.mrb[0].mxu0
    %v781 = vadd.f32 0.0, %v780
    %v782 = vpop.f32.mrb[0].mxu0
    %783 = vdwg.mxu0
    %v784 = vadd.f32 %v599, %v722
    %v785 = vadd.f32 %v600, %v725
    %v786 = vadd.f32 %v601, %v730
    %v787 = vadd.f32 %v602, %v733
    %v788 = vadd.f32 %v603, %v738
    %v789 = vadd.f32 %v604, %v741
    %v790 = vadd.f32 %v605, %v746
    %v791 = vadd.f32 %v606, %v749
    %v792 = vadd.f32 %v607, %v754
    %v793 = vadd.f32 %v608, %v757
    %v794 = vadd.f32 %v609, %v762
    %v795 = vadd.f32 %v610, %v765
    %v796 = vadd.f32 %v611, %v770
    %v797 = vadd.f32 %v612, %v773
    %v798 = vadd.f32 %v613, %v778
    %v799 = vadd.f32 %v614, %v781
    %800 = vst [vmem:[#allocation2] sm:$0xff] %v784
    %801 = vst [vmem:[#allocation2 + $0x8] sm:$0xff] %v785
    %802 = vst [vmem:[#allocation2 + $0x10] sm:$0xff] %v786
    %803 = vst [vmem:[#allocation2 + $0x18] sm:$0xff] %v787
    %804 = vst [vmem:[#allocation2 + $0x20] sm:$0xff] %v788
    %805 = vst [vmem:[#allocation2 + $0x28] sm:$0xff] %v789
    %806 = vst [vmem:[#allocation2 + $0x30] sm:$0xff] %v790
    %807 = vst [vmem:[#allocation2 + $0x38] sm:$0xff] %v791
    %808 = vst [vmem:[#allocation2 + $0x40] sm:$0xff] %v792
    %809 = vst [vmem:[#allocation2 + $0x48] sm:$0xff] %v793
    %810 = vst [vmem:[#allocation2 + $0x50] sm:$0xff] %v794
    %811 = vst [vmem:[#allocation2 + $0x58] sm:$0xff] %v795
    %812 = vst [vmem:[#allocation2 + $0x60] sm:$0xff] %v796
    %813 = vst [vmem:[#allocation2 + $0x68] sm:$0xff] %v797
    %814 = vst [vmem:[#allocation2 + $0x70] sm:$0xff] %v798
    %815 = vst [vmem:[#allocation2 + $0x78] sm:$0xff] %v799
    // Predicated region
    $region50: #{tpu_custom_call.1} parent=1 // pred_check
      %p816 = pneg %p83
    $region51: #{tpu_custom_call.1} parent=1 // pred_check_branch
      %818 = sbr.rel (%p816) target = $region53
    $region52: #{tpu_custom_call.1} parent=1 // pred_region
      %v819 = vld [vmem:[#allocation2] sm:$0xff]
      %v820 = vld [vmem:[#allocation2 + $0x8] sm:$0xff]
      %v821 = vld [vmem:[#allocation2 + $0x10] sm:$0xff]
      %v822 = vld [vmem:[#allocation2 + $0x18] sm:$0xff]
      %v823 = vld [vmem:[#allocation2 + $0x20] sm:$0xff]
      %v824 = vld [vmem:[#allocation2 + $0x28] sm:$0xff]
      %v825 = vld [vmem:[#allocation2 + $0x30] sm:$0xff]
      %v826 = vld [vmem:[#allocation2 + $0x38] sm:$0xff]
      %v827 = vld [vmem:[#allocation2 + $0x40] sm:$0xff]
      %v828 = vld [vmem:[#allocation2 + $0x48] sm:$0xff]
      %v829 = vld [vmem:[#allocation2 + $0x50] sm:$0xff]
      %v830 = vld [vmem:[#allocation2 + $0x58] sm:$0xff]
      %v831 = vld [vmem:[#allocation2 + $0x60] sm:$0xff]
      %v832 = vld [vmem:[#allocation2 + $0x68] sm:$0xff]
      %v833 = vld [vmem:[#allocation2 + $0x70] sm:$0xff]
      %v834 = vld [vmem:[#allocation2 + $0x78] sm:$0xff]
      %v835 = vld [vmem:[%s6] sm:$0x1]
      %v837 = vlaneseq
      %v838 = vshrl.u32 %v837, 7
      %v839 = vsub.s32 0, %v838
      %v840 = vrot.slane %v835, %v839
      %v842 = vadd.f32 %v819, %v840
      %v843 = vadd.f32 %v820, %v840
      %v844 = vadd.f32 %v821, %v840
      %v845 = vadd.f32 %v822, %v840
      %v846 = vadd.f32 %v823, %v840
      %v847 = vadd.f32 %v824, %v840
      %v848 = vadd.f32 %v825, %v840
      %v849 = vadd.f32 %v826, %v840
      %v850 = vadd.f32 %v827, %v840
      %v851 = vadd.f32 %v828, %v840
      %v852 = vadd.f32 %v829, %v840
      %v853 = vadd.f32 %v830, %v840
      %v854 = vadd.f32 %v831, %v840
      %v855 = vadd.f32 %v832, %v840
      %v856 = vadd.f32 %v833, %v840
      %v857 = vadd.f32 %v834, %v840
      %858 = vst [vmem:[#allocation11] sm:$0xff] %v842
      %859 = vst [vmem:[#allocation11 + $0x8] sm:$0xff] %v843
      %860 = vst [vmem:[#allocation11 + $0x10] sm:$0xff] %v844
      %861 = vst [vmem:[#allocation11 + $0x18] sm:$0xff] %v845
      %862 = vst [vmem:[#allocation11 + $0x20] sm:$0xff] %v846
      %863 = vst [vmem:[#allocation11 + $0x28] sm:$0xff] %v847
      %864 = vst [vmem:[#allocation11 + $0x30] sm:$0xff] %v848
      %865 = vst [vmem:[#allocation11 + $0x38] sm:$0xff] %v849
      %866 = vst [vmem:[#allocation11 + $0x40] sm:$0xff] %v850
      %867 = vst [vmem:[#allocation11 + $0x48] sm:$0xff] %v851
      %868 = vst [vmem:[#allocation11 + $0x50] sm:$0xff] %v852
      %869 = vst [vmem:[#allocation11 + $0x58] sm:$0xff] %v853
      %870 = vst [vmem:[#allocation11 + $0x60] sm:$0xff] %v854
      %871 = vst [vmem:[#allocation11 + $0x68] sm:$0xff] %v855
      %872 = vst [vmem:[#allocation11 + $0x70] sm:$0xff] %v856
      %873 = vst [vmem:[#allocation11 + $0x78] sm:$0xff] %v857
    $region53: #{tpu_custom_call.1} parent=1 // pred_fallthru
      _
    // Predicated region
    $region54: #{tpu_custom_call.1} parent=1 // pred_check
      _
    $region55: #{tpu_custom_call.1} parent=1 // pred_check_branch
      %875 = sbr.rel (0) target = $region57
    $region56: #{tpu_custom_call.1} parent=1 // pred_region
      %s877 = ssub.s32 2048, 2048
      %878 = vsyncadd [#allocation5], %s877
      %s879 = sshll.u32 [#allocation11], 4
      %s880 = int_to_ptr.vmem [resolvable:$true] %s879
      %885 = dma.vmem_to_hbm [thread:$0]  %s880, 2048, %s7, [#allocation5], 128, 128, 8
    $region57: #{tpu_custom_call.1} parent=1 // pred_fallthru
      _
    // Predicated region
    $region58: #{tpu_custom_call.1} parent=1 // pred_check
      _
    $region59: #{tpu_custom_call.1} parent=1 // pred_check_branch
      %887 = sbr.rel (0) target = $region61
    $region60: #{tpu_custom_call.1} parent=1 // pred_region
      %888 = dma.done [#allocation5], 2048
    $region61: #{tpu_custom_call.1} parent=1 // pred_fallthru
      _
    %889 = vsyncpa [#allocation4], 1
    %890 = vsyncpa [#allocation7], 1
    %891 = vsyncpa [#allocation10], 1
    %892 = vsyncpa [#allocation5], 1

</llo_original>
